<compile_context>
chip_gen: v5e
topology: v5e:2x2
jax: 0.10.0
libtpu: 0.0.40
codegen_flags: <defaults>
</compile_context>

<pallas_src>
import jax
import jax.numpy as jnp
from jax.experimental import pallas as pl
from jax.experimental.pallas import tpu as pltpu


def temporal_attention_kernel(x_ref, w_ref, b_ref, o_ref):
    """One batch block per grid step.

    x_ref : (bt, F, S)  input features in native layout (seq on lanes)
    w_ref : (F, 1)      attention_linear weight (Linear(F, 1).weight, as column)
    b_ref : (1,)        attention_linear bias (scalar, SMEM)
    o_ref : (bt, F, 1)  attention-weighted features (no T broadcast here)
    """
    x = x_ref[...].astype(jnp.float32)                   # (bt, F, S)
    w = w_ref[...].astype(jnp.float32)                   # (F, 1)

    # scores[b, s] = sum_f x[b, f, s] * w[f] + bias  -> (bt, 1, S), lane-dense
    scores = jnp.sum(x * w[None, :, :], axis=1, keepdims=True) + b_ref[0]

    # numerically-stable softmax over the sequence (lane) axis
    m = jnp.max(scores, axis=-1, keepdims=True)           # (bt, 1, 1)
    e = jnp.exp(scores - m)                                # (bt, 1, S)
    denom = jnp.sum(e, axis=-1, keepdims=True)             # (bt, 1, 1)
    weights = e / denom                                    # exact division

    # attended[b, f] = sum_s x[b, f, s] * weights[b, s]  -> (bt, F, 1)
    attended = jnp.sum(x * weights, axis=-1, keepdims=True)
    o_ref[...] = attended.astype(o_ref.dtype)


def _pick_batch_block(B, F, S, itemsize, target_bytes=4 << 20):
    """Batch tile of a few MiB in the INPUT dtype; never force extra grid
    steps (single-TC chips gain nothing from splitting a fitting batch)."""
    per_batch = max(F * S * itemsize, 1)
    return max(1, min(B, target_bytes // per_batch))


def temporal_attention(x, w_att, b_att, output_seq_len, *, block_batch=None):
    """x: (B, F, S); w_att: (F,); b_att: (); returns (B, F, output_seq_len)."""
    B, F, S = x.shape

    # Tiny parameter repacks only; x itself is passed through untouched.
    w2d = w_att.reshape(F, 1).astype(jnp.float32)
    b1d = b_att.reshape(1).astype(jnp.float32)

    bt = block_batch if block_batch is not None else _pick_batch_block(
        B, F, S, x.dtype.itemsize)
    nb = pl.cdiv(B, bt)
    # TODO(synk): on v7x (2 TensorCores) an even nb shards the "parallel" batch
    # axis evenly; left generation-agnostic here.

    attended = pl.pallas_call(
        temporal_attention_kernel,
        out_shape=jax.ShapeDtypeStruct((B, F, 1), jnp.float32),
        grid_spec=pltpu.PrefetchScalarGridSpec(
            num_scalar_prefetch=0,
            grid=(nb,),
            in_specs=[
                pl.BlockSpec((bt, F, S), lambda i: (i, 0, 0)),
                pl.BlockSpec((F, 1), lambda i: (0, 0)),
                pl.BlockSpec(memory_space=pltpu.MemorySpace.SMEM),
            ],
            out_specs=pl.BlockSpec((bt, F, 1), lambda i: (i, 0, 0)),
        ),
        compiler_params=pltpu.CompilerParams(
            dimension_semantics=("parallel",),
            vmem_limit_bytes=48 << 20),
    )(x, w2d, b1d)

    # Broadcast over the output sequence length OUTSIDE the kernel and return
    # in the module's (B, F, T) layout.
    attended = attended[:, :, 0]                                   # (B, F)
    out = jnp.broadcast_to(attended[:, :, None], (B, F, output_seq_len))
    return out.astype(x.dtype)


def temporal_attention_ref(x, w_att, b_att, output_seq_len):
    """Pure-JAX reference mirroring the PyTorch forward exactly."""
    B, F, S = x.shape
    xp = jnp.transpose(x, (0, 2, 1))                       # (B, S, F)
    scores = jnp.einsum("bsf,f->bs", xp, w_att) + b_att    # (B, S)
    weights = jax.nn.softmax(scores, axis=-1)              # (B, S)
    attended = jnp.sum(xp * weights[..., None], axis=1)    # (B, F)
    out = jnp.broadcast_to(attended[:, None, :], (B, output_seq_len, F))
    return jnp.transpose(out, (0, 2, 1))                   # (B, F, T)


if __name__ == "__main__":
    # Module hyperparameters (small shapes consistent with forward()):
    input_seq_len = 16
    output_seq_len = 8
    feature_dim = 32
    batch = 2

    key = jax.random.PRNGKey(0)
    kx, kw, kb, ktw, ktb = jax.random.split(key, 5)

    # Input: (batch, feature_dim, input_seq_len)
    x = jax.random.normal(kx, (batch, feature_dim, input_seq_len), dtype=jnp.float32)

    # attention_linear = nn.Linear(feature_dim, 1): weight (1, F), bias (1,)
    w_att = jax.random.normal(kw, (feature_dim,), dtype=jnp.float32) * 0.1
    b_att = jax.random.normal(kb, (), dtype=jnp.float32) * 0.1

    # transform = nn.Linear(input_seq_len, output_seq_len): defined in __init__
    # but never used in the PyTorch forward().
    w_transform = jax.random.normal(ktw, (output_seq_len, input_seq_len), dtype=jnp.float32) * 0.1
    b_transform = jax.random.normal(ktb, (output_seq_len,), dtype=jnp.float32) * 0.1
    # TODO(synk): self.transform is unused in the PyTorch forward; parameters are
    # created for parity but intentionally not applied.

    out = temporal_attention(x, w_att, b_att, output_seq_len)
    out = jax.block_until_ready(out)

    ref = temporal_attention_ref(x, w_att, b_att, output_seq_len)
    assert out.shape == (batch, feature_dim, output_seq_len), out.shape
    assert jnp.allclose(out, ref, atol=1e-5, rtol=1e-5), \
        f"max abs err = {jnp.max(jnp.abs(out - ref))}"

    print("KERNEL_OK")
</pallas_src>

<mosaic_0001>
module attributes {stable_mosaic.version = 11 : i64} {
  func.func @temporal_attention_kernel(%arg0: i32, %arg1: memref<2x32x16xf32, #tpu.memory_space<vmem>>, %arg2: memref<32x1xf32, #tpu.memory_space<vmem>>, %arg3: memref<1xf32, #tpu.memory_space<smem>>, %arg4: memref<2x32x1xf32, #tpu.memory_space<vmem>>) attributes {dimension_semantics = [#tpu.dimension_semantics<parallel>], iteration_bounds = array<i64: 1>, scalar_prefetch = 0 : i64, scratch_operands = 0 : i64, tpu.core_type = #tpu.core_type<tc>, window_params = [{transform_indices = @transform_0, window_bounds = array<i64: 2, 32, 16>}, {pipeline_mode = #tpu.pipeline_mode<synchronous>, transform_indices = @transform_1, window_bounds = array<i64: 32, 1>}, {transform_indices = @transform_2, window_bounds = array<i64: 1>}, {transform_indices = @transform_3, window_bounds = array<i64: 2, 32, 1>}]} {
    %c0 = arith.constant 0 : index
    %c0_0 = arith.constant 0 : index
    %c0_1 = arith.constant 0 : index
    %0 = vector.load %arg1[%c0, %c0_0, %c0_1] : memref<2x32x16xf32, #tpu.memory_space<vmem>>, vector<2x32x16xf32>
    %c0_2 = arith.constant 0 : index
    %c0_3 = arith.constant 0 : index
    %1 = vector.load %arg2[%c0_2, %c0_3] : memref<32x1xf32, #tpu.memory_space<vmem>>, vector<32x1xf32>
    %2 = vector.shape_cast %1 : vector<32x1xf32> to vector<1x32x1xf32>
    %3 = vector.broadcast %2 : vector<1x32x1xf32> to vector<2x32x16xf32>
    %4 = arith.mulf %0, %3 : vector<2x32x16xf32>
    %cst = arith.constant dense<0.000000e+00> : vector<2x16xf32>
    %5 = vector.multi_reduction <add>, %4, %cst [1] : vector<2x32x16xf32> to vector<2x16xf32>
    %6 = vector.shape_cast %5 : vector<2x16xf32> to vector<2x1x16xf32>
    %c0_4 = arith.constant 0 : index
    %7 = memref.load %arg3[%c0_4] : memref<1xf32, #tpu.memory_space<smem>>
    %8 = vector.broadcast %7 : f32 to vector<2x1x16xf32>
    %9 = arith.addf %6, %8 : vector<2x1x16xf32>
    %cst_5 = arith.constant dense<0xFF800000> : vector<2x1xf32>
    %10 = vector.multi_reduction <maximumf>, %9, %cst_5 [2] : vector<2x1x16xf32> to vector<2x1xf32>
    %11 = vector.shape_cast %10 : vector<2x1xf32> to vector<2x1x1xf32>
    %12 = vector.broadcast %11 : vector<2x1x1xf32> to vector<2x1x16xf32>
    %13 = arith.subf %9, %12 : vector<2x1x16xf32>
    %14 = math.exp %13 : vector<2x1x16xf32>
    %cst_6 = arith.constant dense<0.000000e+00> : vector<2x1xf32>
    %15 = vector.multi_reduction <add>, %14, %cst_6 [2] : vector<2x1x16xf32> to vector<2x1xf32>
    %16 = vector.shape_cast %15 : vector<2x1xf32> to vector<2x1x1xf32>
    %17 = vector.broadcast %16 : vector<2x1x1xf32> to vector<2x1x16xf32>
    %18 = arith.divf %14, %17 : vector<2x1x16xf32>
    %19 = vector.broadcast %18 : vector<2x1x16xf32> to vector<2x32x16xf32>
    %20 = arith.mulf %0, %19 : vector<2x32x16xf32>
    %cst_7 = arith.constant dense<0.000000e+00> : vector<2x32xf32>
    %21 = vector.multi_reduction <add>, %20, %cst_7 [2] : vector<2x32x16xf32> to vector<2x32xf32>
    %22 = vector.shape_cast %21 : vector<2x32xf32> to vector<2x32x1xf32>
    %c0_8 = arith.constant 0 : index
    %c0_9 = arith.constant 0 : index
    %c0_10 = arith.constant 0 : index
    %23 = vector.load %arg4[%c0_8, %c0_9, %c0_10] : memref<2x32x1xf32, #tpu.memory_space<vmem>>, vector<2x32x1xf32>
    tpu.vector_store %arg4[%c0_8, %c0_9, %c0_10], %22 {strides = array<i32>} : memref<2x32x1xf32, #tpu.memory_space<vmem>>, vector<2x32x1xf32>,
    return
  }
  func.func @transform_0(%arg0: i32) -> (i32, i32, i32) {
    %c0_i32 = arith.constant 0 : i32
    %c0_i32_0 = arith.constant 0 : i32
    %c0_i32_1 = arith.constant 0 : i32
    return %arg0, %c0_i32, %c0_i32_0 : i32, i32, i32
  }
  func.func @transform_1(%arg0: i32) -> (i32, i32) {
    %c0_i32 = arith.constant 0 : i32
    %c0_i32_0 = arith.constant 0 : i32
    %c0_i32_1 = arith.constant 0 : i32
    return %c0_i32, %c0_i32_0 : i32, i32
  }
  func.func @transform_2(%arg0: i32) -> i32 {
    %c0_i32 = arith.constant 0 : i32
    %c0_i32_0 = arith.constant 0 : i32
    return %c0_i32 : i32
  }
  func.func @transform_3(%arg0: i32) -> (i32, i32, i32) {
    %c0_i32 = arith.constant 0 : i32
    %c0_i32_0 = arith.constant 0 : i32
    %c0_i32_1 = arith.constant 0 : i32
    return %arg0, %c0_i32, %c0_i32_0 : i32, i32, i32
  }
}

</mosaic_0001>

<llo_original>
// kernel: tpu_custom_call.1
$region0: #{tpu_custom_call.1}
  #allocation0 [shape = 'u32[]', space=smem, size = 0x4, offset = 0x4, fixed_abs, tag = 'smem constant byte address 0x4 - core index']
  #allocation1 [shape = 'u32[72,128]{1,0:T(1,128)}', space=vmem, size = 0x9000, scoped, tag = 'internal scratch']
  #allocation2 [shape = 'f32[1]{0:T(128)S(6)}', space=smem, size = 0x200, scoped, tag = 'scoped memory for tpu_custom_call.1']
  %s0 = inlined_call_operand.vmem [shape: f32[2,32,16], index: 0, kind: input, shape index: {}]
  %s1 = inlined_call_operand.vmem [shape: f32[32,1], index: 1, kind: input, shape index: {}]
  %s2 = inlined_call_operand.<no memory space> [shape: f32[1], index: 2, kind: input, shape index: {}]
  %s3 = inlined_call_operand.vmem [shape: f32[2,32,1], index: 3, kind: output, shape index: {}]
  %s4 = sld [smem:[#allocation0]]
  $region22: #{tpu_custom_call.1} parent=0
    _
  %s6 = ssub.s32 1, %s4
  %s7 = scalar_select 0, %s6, %s4
  %8 = sst [smem:[#allocation2]] %s2
  // Predicated region
  $region2: #{tpu_custom_call.1} parent=0 // pred_check
    _
  $region3: #{tpu_custom_call.1} parent=0 // pred_check_branch
    %10 = sbr.rel (0) target = $region5
  $region4: #{tpu_custom_call.1} parent=0 // pred_region
    _
  $region5: #{tpu_custom_call.1} parent=0 // pred_fallthru
    _
  // Predicated region
  $region6: #{tpu_custom_call.1} parent=0 // pred_check
    _
  $region7: #{tpu_custom_call.1} parent=0 // pred_check_branch
    %12 = sbr.rel (0) target = $region9
  $region8: #{tpu_custom_call.1} parent=0 // pred_region
    _
  $region9: #{tpu_custom_call.1} parent=0 // pred_fallthru
    _
  // Predicated region
  $region10: #{tpu_custom_call.1} parent=0 // pred_check
    _
  $region11: #{tpu_custom_call.1} parent=0 // pred_check_branch
    %14 = sbr.rel (0) target = $region13
  $region12: #{tpu_custom_call.1} parent=0 // pred_region
    _
  $region13: #{tpu_custom_call.1} parent=0 // pred_fallthru
    _
  %v15 = vld [vmem:[%s0] sm:$0xff]
  %v16 = vld [vmem:[%s0 + $0x8] sm:$0xff]
  %v17 = vld [vmem:[%s0 + $0x10] sm:$0xff]
  %v18 = vld [vmem:[%s0 + $0x18] sm:$0xff]
  %v19 = vld [vmem:[%s0 + $0x20] sm:$0xff]
  %v20 = vld [vmem:[%s0 + $0x28] sm:$0xff]
  %v21 = vld [vmem:[%s0 + $0x30] sm:$0xff]
  %v22 = vld [vmem:[%s0 + $0x38] sm:$0xff]
  %v23 = vld [vmem:[%s1] sm:$0xff]
  %v24 = vld [vmem:[%s1 + $0x8] sm:$0xff]
  %v25 = vld [vmem:[%s1 + $0x10] sm:$0xff]
  %v26 = vld [vmem:[%s1 + $0x18] sm:$0xff]
  %28 = vset.pattern.permute.xlu0 0
  %29 = vperm.xlu0 %28, %v23
  %v30 = vpop.permute.xlu0 %29
  %33 = vset.pattern.permute.xlu0 0
  %34 = vperm.xlu0 %33, %v24
  %v35 = vpop.permute.xlu0 %34
  %38 = vset.pattern.permute.xlu0 0
  %39 = vperm.xlu0 %38, %v25
  %v40 = vpop.permute.xlu0 %39
  %43 = vset.pattern.permute.xlu0 0
  %44 = vperm.xlu0 %43, %v26
  %v45 = vpop.permute.xlu0 %44
  %v47 = vmul.f32 %v15, %v30
  %v48 = vmul.f32 %v16, %v35
  %v49 = vmul.f32 %v17, %v40
  %v50 = vmul.f32 %v18, %v45
  %v51 = vmul.f32 %v19, %v30
  %v52 = vmul.f32 %v20, %v35
  %v53 = vmul.f32 %v21, %v40
  %v54 = vmul.f32 %v22, %v45
  %vm55 = vcmask 130048
  %v56 = vsel %vm55, %v47, 0.0
  %v57 = vsel %vm55, %v48, 0.0
  %v58 = vadd.f32 %v56, %v57
  %v59 = vsel %vm55, %v49, 0.0
  %v60 = vadd.f32 %v58, %v59
  %v61 = vsel %vm55, %v50, 0.0
  %v62 = vadd.f32 %v60, %v61
  %v63 = vrot.slane %v62, 4
  %v64 = vadd.f32 %v62, %v63
  %v65 = vrot.slane %v64, 2
  %v66 = vadd.f32 %v64, %v65
  %v67 = vrot.slane %v66, 1
  %v68 = vadd.f32 %v66, %v67
  %v69 = vsel %vm55, %v51, 0.0
  %v70 = vsel %vm55, %v52, 0.0
  %v71 = vadd.f32 %v69, %v70
  %v72 = vsel %vm55, %v53, 0.0
  %v73 = vadd.f32 %v71, %v72
  %v74 = vsel %vm55, %v54, 0.0
  %v75 = vadd.f32 %v73, %v74
  %v76 = vrot.slane %v75, 4
  %v77 = vadd.f32 %v75, %v76
  %v78 = vrot.slane %v77, 2
  %v79 = vadd.f32 %v77, %v78
  %v80 = vrot.slane %v79, 1
  %v81 = vadd.f32 %v79, %v80
  %s82 = sld [smem:[#allocation2]]
  %v83 = vstv %s82
  %v84 = vadd.f32 %v68, %v83
  %v85 = vadd.f32 %v81, %v83
  %v86 = vsel %vm55, %v84, -inf
  %87 = vmax.xlane.f32.xlu0 %v86
  %v88 = vpop.xlane.xlu0 %87
  %v89 = vsel %vm55, %v85, -inf
  %90 = vmax.xlane.f32.xlu0 %v89
  %v91 = vpop.xlane.xlu0 %90
  %v92 = vsub.f32 %v84, %v88
  %v93 = vsub.f32 %v85, %v91
  %v94 = vmul.f32 %v92, 1.442695
  %v95 = vpow.pop %v94
  %v96 = vmul.f32 %v93, 1.442695
  %v97 = vpow.pop %v96
  %v98 = vsel %vm55, %v95, 0.0
  %99 = vadd.xlane.f32.xlu0 %v98
  %v100 = vpop.xlane.xlu0 %99
  %v101 = vsel %vm55, %v97, 0.0
  %102 = vadd.xlane.f32.xlu0 %v101
  %v103 = vpop.xlane.xlu0 %102
  %v104 = vrcp.pop %v100
  %v105 = vmul.f32 %v100, %v104
  %v106 = vsub.f32 1.0, %v105
  %v107 = vmul.f32 %v104, %v106
  %v108 = vadd.f32 %v104, %v107
  %vm109 = vweird.f32 %v100
  %vm110 = vweird.f32 %v104
  %vm111 = vmor %vm109, %vm110
  %v112 = vsel %vm111, %v104, %v108
  %v113 = vand.u32 2147483647, %v100
  %vm114 = vcmp.eq.f32.partialorder %v113, 8.507059e+37
  %v115 = vand.u32 %v100, 2147483648
  %v116 = vor.u32 1.1754944e-38, %v115
  %v117 = vsel %vm114, %v116, %v112
  %v118 = vmul.f32 %v95, %v117
  %v119 = vrcp.pop %v103
  %v120 = vmul.f32 %v103, %v119
  %v121 = vsub.f32 1.0, %v120
  %v122 = vmul.f32 %v119, %v121
  %v123 = vadd.f32 %v119, %v122
  %vm124 = vweird.f32 %v103
  %vm125 = vweird.f32 %v119
  %vm126 = vmor %vm124, %vm125
  %v127 = vsel %vm126, %v119, %v123
  %v128 = vand.u32 2147483647, %v103
  %vm129 = vcmp.eq.f32.partialorder %v128, 8.507059e+37
  %v130 = vand.u32 %v103, 2147483648
  %v131 = vor.u32 1.1754944e-38, %v130
  %v132 = vsel %vm129, %v131, %v127
  %v133 = vmul.f32 %v97, %v132
  %v134 = vmul.f32 %v15, %v118
  %v135 = vmul.f32 %v16, %v118
  %v136 = vmul.f32 %v17, %v118
  %v137 = vmul.f32 %v18, %v118
  %v138 = vmul.f32 %v19, %v133
  %v139 = vmul.f32 %v20, %v133
  %v140 = vmul.f32 %v21, %v133
  %v141 = vmul.f32 %v22, %v133
  %v142 = vsel %vm55, %v134, 0.0
  %143 = vadd.xlane.f32.xlu0 %v142
  %v144 = vpop.xlane.xlu0 %143
  %v145 = vsel %vm55, %v135, 0.0
  %146 = vadd.xlane.f32.xlu0 %v145
  %v147 = vpop.xlane.xlu0 %146
  %v148 = vsel %vm55, %v136, 0.0
  %149 = vadd.xlane.f32.xlu0 %v148
  %v150 = vpop.xlane.xlu0 %149
  %v151 = vsel %vm55, %v137, 0.0
  %152 = vadd.xlane.f32.xlu0 %v151
  %v153 = vpop.xlane.xlu0 %152
  %v154 = vsel %vm55, %v138, 0.0
  %155 = vadd.xlane.f32.xlu0 %v154
  %v156 = vpop.xlane.xlu0 %155
  %v157 = vsel %vm55, %v139, 0.0
  %158 = vadd.xlane.f32.xlu0 %v157
  %v159 = vpop.xlane.xlu0 %158
  %v160 = vsel %vm55, %v140, 0.0
  %161 = vadd.xlane.f32.xlu0 %v160
  %v162 = vpop.xlane.xlu0 %161
  %v163 = vsel %vm55, %v141, 0.0
  %164 = vadd.xlane.f32.xlu0 %v163
  %v165 = vpop.xlane.xlu0 %164
  %vm166 = vcmask 7168
  %167 = vst.msk [vmem:[%s3] sm:$0xff] %vm166, %v144
  %168 = vst.msk [vmem:[%s3 + $0x8] sm:$0xff] %vm166, %v147
  %169 = vst.msk [vmem:[%s3 + $0x10] sm:$0xff] %vm166, %v150
  %170 = vst.msk [vmem:[%s3 + $0x18] sm:$0xff] %vm166, %v153
  %171 = vst.msk [vmem:[%s3 + $0x20] sm:$0xff] %vm166, %v156
  %172 = vst.msk [vmem:[%s3 + $0x28] sm:$0xff] %vm166, %v159
  %173 = vst.msk [vmem:[%s3 + $0x30] sm:$0xff] %vm166, %v162
  %174 = vst.msk [vmem:[%s3 + $0x38] sm:$0xff] %vm166, %v165
  // Predicated region
  $region14: #{tpu_custom_call.1} parent=0 // pred_check
    _
  $region15: #{tpu_custom_call.1} parent=0 // pred_check_branch
    %176 = sbr.rel (0) target = $region17
  $region16: #{tpu_custom_call.1} parent=0 // pred_region
    _
  $region17: #{tpu_custom_call.1} parent=0 // pred_fallthru
    _
  // Predicated region
  $region18: #{tpu_custom_call.1} parent=0 // pred_check
    _
  $region19: #{tpu_custom_call.1} parent=0 // pred_check_branch
    %178 = sbr.rel (0) target = $region21
  $region20: #{tpu_custom_call.1} parent=0 // pred_region
    _
  $region21: #{tpu_custom_call.1} parent=0 // pred_fallthru
    _

</llo_original>
